<compile_context>
chip_gen: v7x
topology: tpu7x:2x2x1
jax: 0.10.0
libtpu: 0.0.40
codegen_flags: <defaults>
</compile_context>

<pallas_src>
import math

import jax
import jax.numpy as jnp
from jax.experimental import pallas as pl
from jax.experimental.pallas import tpu as pltpu


# ----------------------------- helpers -------------------------------------


def _round_up(v, m):
    return (v + m - 1) // m * m


def _vmem_capacity_bytes():
    """Best-effort VMEM capacity query; conservative 64 MiB (v7x per-TC) default."""
    try:
        info = pltpu.get_tpu_info()
        for name in ("vmem_capacity_bytes", "vmem_size_bytes", "vmem_bytes"):
            cap = getattr(info, name, None)
            if cap:
                return int(cap)
    except Exception:
        pass
    return 64 * 1024 * 1024


def _pick_tm(m, candidates):
    """Largest M tile (multiple of 8) keeping zero-padding waste <= ~25%."""
    m8 = _round_up(max(m, 1), 8)
    for tm in candidates:
        if _round_up(m8, tm) <= max(m8 * 5 // 4, m8 + 8):
            return tm
    return 8


def _largest_divisor(total, candidates):
    for c in candidates:
        if total % c == 0:
            return c
    return 128  # total is always a multiple of 128


# ----------------------------- kernels -------------------------------------


def _linear_kernel_resident(x_ref, w_ref, b_ref, o_ref):
    # x_ref: (TM, Kp), w_ref: (Kp, Np) resident, b_ref: (1, Np) f32, o_ref: (TM, Np)
    o_ref[...] = (
        jnp.dot(x_ref[...], w_ref[...], preferred_element_type=jnp.float32)
        + b_ref[...]
    ).astype(o_ref.dtype)


def _linear_kernel_tiled(x_ref, w_ref, b_ref, o_ref, acc_ref):
    # x_ref: (TM, TK), w_ref: (TK, TN), b_ref: (1, TN) f32,
    # o_ref: (TM, TN), acc_ref: (TM, TN) f32 scratch.  K is grid axis 2 (last).
    k = pl.program_id(2)

    @pl.when(k == 0)
    def _():
        acc_ref[...] = jnp.zeros_like(acc_ref)

    acc_ref[...] += jnp.dot(
        x_ref[...], w_ref[...], preferred_element_type=jnp.float32
    )

    @pl.when(k == pl.num_programs(2) - 1)
    def _():
        o_ref[...] = (acc_ref[...] + b_ref[...]).astype(o_ref.dtype)


# ----------------------------- forward -------------------------------------


def linear_norm_forward(
    x, weight_t, bias, *, compute_dtype=None, force_pallas=False, _force_path=None
):
    """y = x @ weight_t + bias applied over the last axis of x.

    x:        (..., in_dim)
    weight_t: (in_dim, out_dim)   # transposed vs torch's (out_dim, in_dim)
    bias:     (out_dim,)
    compute_dtype: optionally cast x/weight (e.g. jnp.bfloat16) before the GEMM;
                   accumulation and the bias add stay in f32, output keeps x.dtype.
    """
    in_dim, out_dim = weight_t.shape
    lead = x.shape[:-1]
    m = int(math.prod(lead)) if lead else 1
    out_dtype = x.dtype
    x2d = x.reshape(m, in_dim)

    # Tiny linears: a single fused XLA dot beats padding + pipeline overhead.
    if not force_pallas and (m * in_dim * out_dim) < (1 << 20):
        y = (x2d @ weight_t + bias).astype(out_dtype)
        return y.reshape(*lead, out_dim)

    if compute_dtype is not None:
        x2d = x2d.astype(compute_dtype)
        weight_t = weight_t.astype(compute_dtype)

    x_item = x2d.dtype.itemsize
    w_item = weight_t.dtype.itemsize
    o_item = jnp.dtype(out_dtype).itemsize

    vmem_cap = _vmem_capacity_bytes()
    budget = int(vmem_cap * 0.55)  # leave headroom for compiler-internal scratch
    big_vmem = vmem_cap >= (96 << 20)  # 128 MiB parts (v5e/v6e) -> bigger tiles

    tm_cands = ((1024, 512, 384, 256, 192, 128, 64, 32, 16, 8)
                if big_vmem else (512, 384, 256, 192, 128, 64, 32, 16, 8))
    kn_cands = ((1024, 768, 512, 384, 256, 128)
                if big_vmem else (512, 384, 256, 128))

    k_pad = _round_up(in_dim, 128)
    n_pad = _round_up(out_dim, 128)

    tm = _pick_tm(m, tm_cands)

    # Resident-weight path feasibility (count double buffers conservatively).
    resident_fixed = 2 * k_pad * n_pad * w_item + 2 * n_pad * 4
    resident_per_m = 2 * (k_pad * x_item + n_pad * o_item)
    use_resident = (_force_path != "tiled") and (
        _force_path == "resident"
        or resident_fixed + tm * resident_per_m <= budget
    )

    b_f32 = bias.astype(jnp.float32)  # f32 once; no per-tile cast in the kernel

    def _pad_operands(m_pad):
        xp = x2d
        if (m_pad, k_pad) != (m, in_dim):
            xp = jnp.pad(x2d, ((0, m_pad - m), (0, k_pad - in_dim)))
        wp = weight_t
        if (k_pad, n_pad) != (in_dim, out_dim):
            wp = jnp.pad(weight_t, ((0, k_pad - in_dim), (0, n_pad - out_dim)))
        bp = b_f32 if n_pad == out_dim else jnp.pad(b_f32, (0, n_pad - out_dim))
        return xp, wp, bp.reshape(1, n_pad)

    if use_resident:
        m_pad = _round_up(_round_up(m, 8), tm)
        # Ensure >= 2 parallel tiles so v7x's second TensorCore is not idle.
        if m_pad // tm < 2 and tm >= 16:
            tm //= 2
        xp, wp, bp = _pad_operands(m_pad)

        footprint = resident_fixed + tm * resident_per_m
        vmem_limit = min(int(vmem_cap * 0.85), footprint + (32 << 20))
        cost = pl.CostEstimate(
            flops=2 * m_pad * k_pad * n_pad,
            transcendentals=0,
            bytes_accessed=(
                m_pad * k_pad * x_item          # x streamed once
                + k_pad * n_pad * w_item        # weight fetched once (resident)
                + n_pad * 4
                + m_pad * n_pad * o_item
            ),
        )

        y_pad = pl.pallas_call(
            _linear_kernel_resident,
            out_shape=jax.ShapeDtypeStruct((m_pad, n_pad), out_dtype),
            grid_spec=pltpu.PrefetchScalarGridSpec(
                num_scalar_prefetch=0,
                grid=(m_pad // tm,),
                in_specs=[
                    pl.BlockSpec((tm, k_pad), lambda i: (i, 0)),      # x tile
                    pl.BlockSpec((k_pad, n_pad), lambda i: (0, 0)),   # weight: resident
                    pl.BlockSpec((1, n_pad), lambda i: (0, 0)),       # bias: resident
                ],
                out_specs=pl.BlockSpec((tm, n_pad), lambda i: (i, 0)),
            ),
            compiler_params=pltpu.CompilerParams(
                dimension_semantics=("parallel",),
                vmem_limit_bytes=vmem_limit,
            ),
            cost_estimate=cost,
        )(xp, wp, bp)
    else:
        tk = _largest_divisor(k_pad, kn_cands)
        tn = _largest_divisor(n_pad, kn_cands)

        def tiled_bytes(tm_):
            return (2 * tm_ * tk * x_item + 2 * tk * tn * w_item
                    + 2 * tm_ * tn * o_item + 2 * tn * 4 + tm_ * tn * 4)

        while tm > 8 and tiled_bytes(tm) > budget:
            tm = max(8, (tm // 2) // 8 * 8)

        m_pad = _round_up(_round_up(m, 8), tm)
        if m_pad // tm < 2 and tm >= 16:  # feed both TensorCores on v7x
            tm //= 2
        xp, wp, bp = _pad_operands(m_pad)

        m_tiles, n_tiles, k_tiles = m_pad // tm, n_pad // tn, k_pad // tk
        footprint = tiled_bytes(tm)
        vmem_limit = min(int(vmem_cap * 0.85), footprint + (32 << 20))
        cost = pl.CostEstimate(
            flops=2 * m_pad * k_pad * n_pad,
            transcendentals=0,
            bytes_accessed=(
                m_pad * k_pad * x_item * n_tiles    # x re-streamed per N tile
                + k_pad * n_pad * w_item * m_tiles  # weight re-streamed per M tile
                + n_pad * 4 * m_tiles
                + m_pad * n_pad * o_item
            ),
        )

        y_pad = pl.pallas_call(
            _linear_kernel_tiled,
            out_shape=jax.ShapeDtypeStruct((m_pad, n_pad), out_dtype),
            grid_spec=pltpu.PrefetchScalarGridSpec(
                num_scalar_prefetch=0,
                grid=(m_tiles, n_tiles, k_tiles),
                in_specs=[
                    pl.BlockSpec((tm, tk), lambda i, j, k: (i, k)),   # x tile
                    pl.BlockSpec((tk, tn), lambda i, j, k: (k, j)),   # weight tile
                    pl.BlockSpec((1, tn), lambda i, j, k: (0, j)),    # bias tile
                ],
                out_specs=pl.BlockSpec((tm, tn), lambda i, j, k: (i, j)),
                scratch_shapes=[pltpu.VMEM((tm, tn), jnp.float32)],
            ),
            compiler_params=pltpu.CompilerParams(
                # M/N tiles independent -> parallel (megacore); K reduction last.
                dimension_semantics=("parallel", "parallel", "arbitrary"),
                vmem_limit_bytes=vmem_limit,
            ),
            cost_estimate=cost,
        )(xp, wp, bp)

    y2d = y_pad[:m, :out_dim]
    return y2d.reshape(*lead, out_dim)


# ----------------------------- init (xavier_uniform_) ----------------------


def init_linear_norm_params(key, in_dim, out_dim, w_init_gain="linear"):
    """xavier_uniform_ weight (gain per torch calculate_gain) + torch-default bias."""
    gain = {"linear": 1.0, "relu": math.sqrt(2.0), "tanh": 5.0 / 3.0}[w_init_gain]
    bound = gain * math.sqrt(6.0 / (in_dim + out_dim))
    wkey, bkey = jax.random.split(key)
    # torch weight is (out_dim, in_dim); we store the transpose (in_dim, out_dim).
    weight_t = jax.random.uniform(
        wkey, (in_dim, out_dim), minval=-bound, maxval=bound, dtype=jnp.float32
    )
    bb = 1.0 / math.sqrt(in_dim)
    bias = jax.random.uniform(
        bkey, (out_dim,), minval=-bb, maxval=bb, dtype=jnp.float32
    )
    return weight_t, bias


# ----------------------------- demo / self-check ---------------------------

if __name__ == "__main__":
    key = jax.random.PRNGKey(0)
    k_x1, k_x2, k_p1, k_p2 = jax.random.split(key, 4)

    # Case 1: tiny LinearNorm — force the Pallas resident-weight kernel.
    batch, seq, in_dim, out_dim = 2, 8, 32, 64
    x = jax.random.normal(k_x1, (batch, seq, in_dim), dtype=jnp.float32)
    w_t, b = init_linear_norm_params(k_p1, in_dim, out_dim, "linear")

    y = linear_norm_forward(x, w_t, b, force_pallas=True)
    jax.block_until_ready(y)
    y_ref = x @ w_t + b
    assert y.shape == (batch, seq, out_dim)
    assert jnp.allclose(y, y_ref, atol=2e-5, rtol=2e-5)

    # Default dispatch: same tiny shape takes the fused-XLA-dot fallback.
    y_fb = linear_norm_forward(x, w_t, b)
    jax.block_until_ready(y_fb)
    assert jnp.allclose(y_fb, y_ref, atol=2e-5, rtol=2e-5)

    # Case 2: moderate shape exercising the tiled (M, N, K) kernel
    # (non-multiple-of-128 in/out dims also exercise the zero-padding path).
    batch2, seq2, in_dim2, out_dim2 = 2, 64, 192, 320
    x2 = jax.random.normal(k_x2, (batch2, seq2, in_dim2), dtype=jnp.float32)
    w_t2, b2 = init_linear_norm_params(k_p2, in_dim2, out_dim2, "relu")
    y2 = linear_norm_forward(x2, w_t2, b2, force_pallas=True, _force_path="tiled")
    jax.block_until_ready(y2)
    y2_ref = x2 @ w_t2 + b2
    assert y2.shape == (batch2, seq2, out_dim2)
    assert jnp.allclose(y2, y2_ref, atol=5e-4, rtol=5e-4)

    print("KERNEL_OK")
</pallas_src>

<mosaic_0001>
module attributes {stable_mosaic.version = 11 : i64} {
  func.func @_linear_kernel_resident(%arg0: i32, %arg1: memref<8x128xf32, #tpu.memory_space<vmem>>, %arg2: memref<128x128xf32, #tpu.memory_space<vmem>>, %arg3: memref<1x128xf32, #tpu.memory_space<vmem>>, %arg4: memref<8x128xf32, #tpu.memory_space<vmem>>) attributes {dimension_semantics = [#tpu.dimension_semantics<parallel>], iteration_bounds = array<i64: 2>, scalar_prefetch = 0 : i64, scratch_operands = 0 : i64, tpu.core_type = #tpu.core_type<tc>, window_params = [{transform_indices = @transform_0, window_bounds = array<i64: 8, 128>}, {pipeline_mode = #tpu.pipeline_mode<synchronous>, transform_indices = @transform_1, window_bounds = array<i64: 128, 128>}, {pipeline_mode = #tpu.pipeline_mode<synchronous>, transform_indices = @transform_2, window_bounds = array<i64: 1, 128>}, {transform_indices = @transform_3, window_bounds = array<i64: 8, 128>}]} {
    %c0 = arith.constant 0 : index
    %c0_0 = arith.constant 0 : index
    %0 = vector.load %arg1[%c0, %c0_0] : memref<8x128xf32, #tpu.memory_space<vmem>>, vector<8x128xf32>
    %c0_1 = arith.constant 0 : index
    %c0_2 = arith.constant 0 : index
    %1 = vector.load %arg2[%c0_1, %c0_2] : memref<128x128xf32, #tpu.memory_space<vmem>>, vector<128x128xf32>
    %cst = arith.constant dense<0.000000e+00> : vector<8x128xf32>
    %2 = tpu.matmul %0, %1, %cst {dimension_numbers = #tpu.dot_dimension_numbers<[1], [0], [0], [1], [0, 0, 1, 1], [], []>} : vector<8x128xf32>, vector<128x128xf32>, vector<8x128xf32> -> vector<8x128xf32>
    %c0_3 = arith.constant 0 : index
    %c0_4 = arith.constant 0 : index
    %3 = vector.load %arg3[%c0_3, %c0_4] : memref<1x128xf32, #tpu.memory_space<vmem>>, vector<1x128xf32>
    %4 = vector.broadcast %3 : vector<1x128xf32> to vector<8x128xf32>
    %5 = arith.addf %2, %4 : vector<8x128xf32>
    %c0_5 = arith.constant 0 : index
    %c0_6 = arith.constant 0 : index
    %6 = vector.load %arg4[%c0_5, %c0_6] : memref<8x128xf32, #tpu.memory_space<vmem>>, vector<8x128xf32>
    tpu.vector_store %arg4[%c0_5, %c0_6], %5 {strides = array<i32>} : memref<8x128xf32, #tpu.memory_space<vmem>>, vector<8x128xf32>,
    return
  }
  func.func @transform_0(%arg0: i32) -> (i32, i32) {
    %c0_i32 = arith.constant 0 : i32
    %c0_i32_0 = arith.constant 0 : i32
    return %arg0, %c0_i32 : i32, i32
  }
  func.func @transform_1(%arg0: i32) -> (i32, i32) {
    %c0_i32 = arith.constant 0 : i32
    %c0_i32_0 = arith.constant 0 : i32
    %c0_i32_1 = arith.constant 0 : i32
    return %c0_i32, %c0_i32_0 : i32, i32
  }
  func.func @transform_2(%arg0: i32) -> (i32, i32) {
    %c0_i32 = arith.constant 0 : i32
    %c0_i32_0 = arith.constant 0 : i32
    %c0_i32_1 = arith.constant 0 : i32
    return %c0_i32, %c0_i32_0 : i32, i32
  }
  func.func @transform_3(%arg0: i32) -> (i32, i32) {
    %c0_i32 = arith.constant 0 : i32
    %c0_i32_0 = arith.constant 0 : i32
    return %arg0, %c0_i32 : i32, i32
  }
}

</mosaic_0001>

<llo_original>
// kernel: tpu_custom_call.1
$region0: #{tpu_custom_call.1}
  #allocation0 [shape = 'u32[]', space=smem, size = 0x4, offset = 0x4, fixed_abs, tag = 'smem constant byte address 0x4 - core index']
  #allocation1 [shape = 'u32[144,128]{1,0:T(1,128)}', space=vmem, size = 0x12000, scoped, tag = 'internal scratch']
  %s0 = inlined_call_operand.hbm [shape: f32[16,128], index: 0, kind: input, shape index: {}]
  %s1 = inlined_call_operand.hbm [shape: f32[128,128], index: 1, kind: input, shape index: {}]
  %s2 = inlined_call_operand.vmem [shape: f32[1,128], index: 2, kind: input, shape index: {}]
  %s3 = inlined_call_operand.hbm [shape: f32[16,128], index: 3, kind: output, shape index: {}]
  %s4 = sld [smem:[#allocation0]]
  $region53: #{tpu_custom_call.1} parent=0
    _
  %s6 = ssub.s32 1, %s4
  %s7 = scalar_select 0, %s6, %s4
  $region1: #{tpu_custom_call.1} parent=0
    #allocation2 [shape = 'u8[8192]{0}', space=vmem, size = 0x2000, scoped, tag = 'input window, operand 0']
    #allocation3 [shape = 's32[2]{0}', space=sflag, size = 0x8, scoped, tag = 'scoped memory for tpu_custom_call.1']
    #allocation4 [shape = 's32[2]{0}', space=sflag, size = 0x8, scoped, tag = 'scoped memory for tpu_custom_call.1']
    #allocation5 [shape = 'u8[65536]{0}', space=vmem, size = 0x10000, scoped, tag = 'input window, operand 1, single buffered']
    #allocation6 [shape = 's32[1]{0}', space=sflag, size = 0x4, scoped, tag = 'scoped memory for tpu_custom_call.1']
    #allocation7 [shape = 'u8[8192]{0}', space=vmem, size = 0x2000, scoped, tag = 'output window, operand 0']
    %8 = vsyncpa [#allocation3], 0
    %s9 = scalar_lea.sflag [#allocation3], 1
    %10 = vsyncpa %s9, 0
    %11 = vsyncpa [#allocation6], 0
    %12 = vsyncpa [#allocation4], 0
    %s13 = scalar_lea.sflag [#allocation4], 1
    %14 = vsyncpa %s13, 0
    loop: start=0, step=1, limit=4
    $region2: #{tpu_custom_call.1} parent=1 // loop_pre_header
      _
    $region3: #{tpu_custom_call.1} parent=1 // loop_header
      %s16 = sphi 0, %s20
      %p17 = scmp.ge.s32.totalorder %s16, 4
      %s26 = sphi 0, %s28
      %s29 = sphi 0, %s26
      %s30 = sphi 0, %s29
      %s46 = sphi 0, %s30
      %s50 = sphi 0, %s50
      %s52 = sphi 0, %s50
      %s53 = sphi 0, %s52
      %s67 = sphi 0, %s53
      %s71 = sphi 0, %s71
      %s73 = sphi 0, %s71
      %s74 = sphi 0, %s73
      %s88 = sphi 0, %s74
      %s94 = sphi 0, %s96
      %s97 = sphi 0, %s94
      %s98 = sphi 0, %s97
      %s114 = sphi 0, %s98
    $region4: #{tpu_custom_call.1} parent=1 // loop_header_branch
      %19 = sbr.rel (%p17) target = $region8
    $region5: #{tpu_custom_call.1} parent=1 // loop_body
      %s21 = ssub.s32 %s16, 1
      %s22 = ssub.s32 %s16, 2
      %s23 = sadd.s32 %s16, 1
      %s24 = ssub.s32 %s16, %s23
      %p25 = scmp.eq.s32.totalorder %s24, 0
      %s27 = sadd.s32 %s26, 1
      %s28 = scalar_select %p25, %s26, %s27
      %p31 = pneg %p25
      %p32 = scmp.eq.s32.totalorder %s16, 1
      %p33 = por %p31, %p32
      %p34 = scmp.ne.s32.totalorder %s26, %s29
      %p35 = scmp.eq.s32.totalorder %s16, 0
      %p36 = por %p34, %p35
      %p37 = scmp.ne.s32.totalorder %s26, %s29
      %p38 = scmp.eq.s32.totalorder %s21, 1
      %p39 = por %p37, %p38
      %p40 = scmp.ne.s32.totalorder %s29, %s30
      %p41 = scmp.eq.s32.totalorder %s21, 0
      %p42 = por %p40, %p41
      %p43 = scmp.ne.s32.totalorder %s29, %s30
      %p44 = scmp.eq.s32.totalorder %s22, 1
      %p45 = por %p43, %p44
      %p47 = scmp.ne.s32.totalorder %s30, %s46
      %p48 = scmp.eq.s32.totalorder %s22, 0
      %p49 = por %p47, %p48
      %s51 = sadd.s32 %s50, 1
      %p54 = scmp.eq.s32.totalorder %s16, 1
      %p55 = scmp.ne.s32.totalorder %s50, %s52
      %p56 = scmp.eq.s32.totalorder %s16, 0
      %p57 = por %p55, %p56
      %p58 = scmp.ne.s32.totalorder %s50, %s52
      %p59 = scmp.eq.s32.totalorder %s21, 1
      %p60 = por %p58, %p59
      %p61 = scmp.ne.s32.totalorder %s52, %s53
      %p62 = scmp.eq.s32.totalorder %s21, 0
      %p63 = por %p61, %p62
      %p64 = scmp.ne.s32.totalorder %s52, %s53
      %p65 = scmp.eq.s32.totalorder %s22, 1
      %p66 = por %p64, %p65
      %p68 = scmp.ne.s32.totalorder %s53, %s67
      %p69 = scmp.eq.s32.totalorder %s22, 0
      %p70 = por %p68, %p69
      %s72 = sadd.s32 %s71, 1
      %p75 = scmp.eq.s32.totalorder %s16, 1
      %p76 = scmp.ne.s32.totalorder %s71, %s73
      %p77 = scmp.eq.s32.totalorder %s16, 0
      %p78 = por %p76, %p77
      %p79 = scmp.ne.s32.totalorder %s71, %s73
      %p80 = scmp.eq.s32.totalorder %s21, 1
      %p81 = por %p79, %p80
      %p82 = scmp.ne.s32.totalorder %s73, %s74
      %p83 = scmp.eq.s32.totalorder %s21, 0
      %p84 = por %p82, %p83
      %p85 = scmp.ne.s32.totalorder %s73, %s74
      %p86 = scmp.eq.s32.totalorder %s22, 1
      %p87 = por %p85, %p86
      %p89 = scmp.ne.s32.totalorder %s74, %s88
      %p90 = scmp.eq.s32.totalorder %s22, 0
      %p91 = por %p89, %p90
      %s92 = ssub.s32 %s16, %s23
      %p93 = scmp.eq.s32.totalorder %s92, 0
      %s95 = sadd.s32 %s94, 1
      %s96 = scalar_select %p93, %s94, %s95
      %p99 = pneg %p93
      %p100 = scmp.eq.s32.totalorder %s16, 1
      %p101 = por %p99, %p100
      %p102 = scmp.ne.s32.totalorder %s94, %s97
      %p103 = scmp.eq.s32.totalorder %s16, 0
      %p104 = por %p102, %p103
      %p105 = scmp.ne.s32.totalorder %s94, %s97
      %p106 = scmp.eq.s32.totalorder %s21, 1
      %p107 = por %p105, %p106
      %p108 = scmp.ne.s32.totalorder %s97, %s98
      %p109 = scmp.eq.s32.totalorder %s21, 0
      %p110 = por %p108, %p109
      %p111 = scmp.ne.s32.totalorder %s97, %s98
      %p112 = scmp.eq.s32.totalorder %s22, 1
      %p113 = por %p111, %p112
      %p115 = scmp.ne.s32.totalorder %s98, %s114
      %p116 = scmp.eq.s32.totalorder %s22, 0
      %p117 = por %p115, %p116
      %p118 = scmp.le.s32.totalorder 1, %s16
      %p119 = scmp.lt.s32.totalorder %s16, 3
      %p120 = pnand %p118, %p119
      %p121 = pneg %p120
      // Predicated region
      $region9: #{tpu_custom_call.1} parent=5 // pred_check
        _
      $region10: #{tpu_custom_call.1} parent=5 // pred_check_branch
        %123 = sbr.rel (%p120) target = $region12
      $region11: #{tpu_custom_call.1} parent=5 // pred_region
        %s124 = ssub.s32 %s16, 1
        // Predicated region
        $region13: #{tpu_custom_call.1} parent=11 // pred_check
          %p125 = pneg %p63
        $region14: #{tpu_custom_call.1} parent=11 // pred_check_branch
          %127 = sbr.rel (%p125) target = $region16
        $region15: #{tpu_custom_call.1} parent=11 // pred_region
          %s129 = ssub.s32 2048, 2048
          %130 = vsyncadd [#allocation6], %s129
          %s131 = sshll.u32 [#allocation5], 4
          %s132 = int_to_ptr.vmem [resolvable:$true] %s131
          %137 = dma.hbm_to_vmem [thread:$0]  %s1, 2048, %s132, [#allocation6], 128, 128, 8
        $region16: #{tpu_custom_call.1} parent=11 // pred_fallthru
          _
        // Predicated region
        $region17: #{tpu_custom_call.1} parent=11 // pred_check
          %p138 = pneg %p84
        $region18: #{tpu_custom_call.1} parent=11 // pred_check_branch
          %140 = sbr.rel (%p138) target = $region20
        $region19: #{tpu_custom_call.1} parent=11 // pred_region
          _
        $region20: #{tpu_custom_call.1} parent=11 // pred_fallthru
          _
      $region12: #{tpu_custom_call.1} parent=5 // pred_fallthru
        _
      %p141 = scmp.lt.s32.totalorder %s16, 2
      // Predicated region
      $region21: #{tpu_custom_call.1} parent=5 // pred_check
        %p142 = pneg %p141
      $region22: #{tpu_custom_call.1} parent=5 // pred_check_branch
        %144 = sbr.rel (%p142) target = $region24
      $region23: #{tpu_custom_call.1} parent=5 // pred_region
        // Predicated region
        $region25: #{tpu_custom_call.1} parent=23 // pred_check
          %p145 = pneg %p36
        $region26: #{tpu_custom_call.1} parent=23 // pred_check_branch
          %147 = sbr.rel (%p145) target = $region28
        $region27: #{tpu_custom_call.1} parent=23 // pred_region
          %s148 = sand.u32 %s26, 1
          %s149 = scalar_lea.sflag [#allocation3], %s148
          %s150 = sand.u32 %s26, 1
          %s151 = smul.addr %s150, 8
          %s152 = scalar_lea.vmem [#allocation2], %s151
          %s154 = ssub.s32 128, 128
          %155 = vsyncadd %s149, %s154
          %s156 = smul.addr %s16, 128
          %s157 = scalar_lea.hbm %s0, %s156
          %s159 = sshll.u32 %s152, 4
          %s160 = int_to_ptr.vmem [resolvable:$true] %s159
          %162 = dma.hbm_to_vmem [thread:$0]  %s157, 128, %s160, %s149
        $region28: #{tpu_custom_call.1} parent=23 // pred_fallthru
          _
      $region24: #{tpu_custom_call.1} parent=5 // pred_fallthru
        _
      %p163 = scmp.le.s32.totalorder 1, %s16
      %p164 = scmp.lt.s32.totalorder %s16, 3
      %p165 = pnand %p163, %p164
      %p166 = pneg %p165
      // Predicated region
      $region29: #{tpu_custom_call.1} parent=5 // pred_check
        _
      $region30: #{tpu_custom_call.1} parent=5 // pred_check_branch
        %168 = sbr.rel (%p165) target = $region32
      $region31: #{tpu_custom_call.1} parent=5 // pred_region
        %s169 = ssub.s32 %s16, 1
        %s170 = sand.u32 %s29, 1
        %s171 = scalar_lea.sflag [#allocation3], %s170
        %s172 = sand.u32 %s29, 1
        %s173 = smul.addr %s172, 8
        %s174 = scalar_lea.vmem [#allocation2], %s173
        // Predicated region
        $region33: #{tpu_custom_call.1} parent=31 // pred_check
          %p175 = pneg %p42
        $region34: #{tpu_custom_call.1} parent=31 // pred_check_branch
          %177 = sbr.rel (%p175) target = $region36
        $region35: #{tpu_custom_call.1} parent=31 // pred_region
          %178 = dma.done %s171, 128
        $region36: #{tpu_custom_call.1} parent=31 // pred_fallthru
          _
        // Predicated region
        $region37: #{tpu_custom_call.1} parent=31 // pred_check
          %p179 = pneg %p63
        $region38: #{tpu_custom_call.1} parent=31 // pred_check_branch
          %181 = sbr.rel (%p179) target = $region40
        $region39: #{tpu_custom_call.1} parent=31 // pred_region
          %182 = dma.done [#allocation6], 2048
        $region40: #{tpu_custom_call.1} parent=31 // pred_fallthru
          _
        %s183 = sand.u32 %s29, 1
        %s184 = scalar_lea.sflag [#allocation3], %s183
        %s185 = sand.u32 %s29, 1
        %s186 = smul.addr %s185, 8
        %s187 = scalar_lea.vmem [#allocation2], %s186
        %p188 = pneg %p42
        %p189 = pneg %p39
        %p190 = pneg %p63
        %p191 = pneg %p60
        %p192 = pneg %p84
        %p193 = pneg %p81
        %p194 = pneg %p110
        %p195 = pneg %p107
        %s196 = sand.u32 %s97, 1
        %s197 = scalar_lea.sflag [#allocation4], %s196
        %s198 = sand.u32 %s97, 1
        %s199 = smul.addr %s198, 8
        %s200 = scalar_lea.vmem [#allocation7], %s199
        %v201 = vld [vmem:[%s174] sm:$0xff]
        %v202 = vld [vmem:[#allocation5] sm:$0xff]
        %v203 = vld [vmem:[#allocation5 + $0x8] sm:$0xff]
        %v204 = vld [vmem:[#allocation5 + $0x10] sm:$0xff]
        %v205 = vld [vmem:[#allocation5 + $0x18] sm:$0xff]
        %v206 = vld [vmem:[#allocation5 + $0x20] sm:$0xff]
        %v207 = vld [vmem:[#allocation5 + $0x28] sm:$0xff]
        %v208 = vld [vmem:[#allocation5 + $0x30] sm:$0xff]
        %v209 = vld [vmem:[#allocation5 + $0x38] sm:$0xff]
        %v210 = vld [vmem:[#allocation5 + $0x40] sm:$0xff]
        %v211 = vld [vmem:[#allocation5 + $0x48] sm:$0xff]
        %v212 = vld [vmem:[#allocation5 + $0x50] sm:$0xff]
        %v213 = vld [vmem:[#allocation5 + $0x58] sm:$0xff]
        %v214 = vld [vmem:[#allocation5 + $0x60] sm:$0xff]
        %v215 = vld [vmem:[#allocation5 + $0x68] sm:$0xff]
        %v216 = vld [vmem:[#allocation5 + $0x70] sm:$0xff]
        %v217 = vld [vmem:[#allocation5 + $0x78] sm:$0xff]
        %v218 = vld [vmem:[%s2] sm:$0x1]
        %v220 = vlaneseq
        %v221 = vshrl.u32 %v220, 7
        %v222 = vsub.s32 0, %v221
        %v223 = vrot.slane %v218, %v222
        %225 = vmatprep.subr.mxu0 0.0
        %226 = vmatpush1.msra.mxu0 %v202
        %227 = vmatprep.subr.mxu0 0.0
        %228 = vmatpush1.msra.mxu0 %v203
        %229 = vmatprep.subr.mxu0 0.0
        %230 = vmatpush1.msra.mxu0 %v204
        %231 = vmatprep.subr.mxu0 0.0
        %232 = vmatpush1.msra.mxu0 %v205
        %233 = vmatprep.subr.mxu0 0.0
        %234 = vmatpush1.msra.mxu0 %v206
        %235 = vmatprep.subr.mxu0 0.0
        %236 = vmatpush1.msra.mxu0 %v207
        %237 = vmatprep.subr.mxu0 0.0
        %238 = vmatpush1.msra.mxu0 %v208
        %239 = vmatprep.subr.mxu0 0.0
        %240 = vmatpush1.msra.mxu0 %v209
        %241 = vmatprep.subr.mxu0 0.0
        %242 = vmatpush1.msra.mxu0 %v210
        %243 = vmatprep.subr.mxu0 0.0
        %244 = vmatpush1.msra.mxu0 %v211
        %245 = vmatprep.subr.mxu0 0.0
        %246 = vmatpush1.msra.mxu0 %v212
        %247 = vmatprep.subr.mxu0 0.0
        %248 = vmatpush1.msra.mxu0 %v213
        %249 = vmatprep.subr.mxu0 0.0
        %250 = vmatpush1.msra.mxu0 %v214
        %251 = vmatprep.subr.mxu0 0.0
        %252 = vmatpush1.msra.mxu0 %v215
        %253 = vmatprep.subr.mxu0 0.0
        %254 = vmatpush1.msra.mxu0 %v216
        %255 = vmatprep.subr.mxu0 0.0
        %256 = vmatpush1.msra.mxu0 %v217
        %257 = vmatprep.subr.mxu0 0.0
        %258 = vmatpush1.msra.mxu0 0.0
        %259 = vmatprep.subr.mxu0 0.0
        %260 = vmatpush1.msra.mxu0 0.0
        %261 = vmatprep.subr.mxu0 0.0
        %262 = vmatpush1.msra.mxu0 0.0
        %263 = vmatprep.subr.mxu0 0.0
        %264 = vmatpush1.msra.mxu0 0.0
        %265 = vmatprep.subr.mxu0 0.0
        %266 = vmatpush1.msra.mxu0 0.0
        %267 = vmatprep.subr.mxu0 0.0
        %268 = vmatpush1.msra.mxu0 0.0
        %269 = vmatprep.subr.mxu0 0.0
        %270 = vmatpush1.msra.mxu0 0.0
        %271 = vmatprep.subr.mxu0 0.0
        %272 = vmatpush1.msra.mxu0 0.0
        %273 = vmatprep.subr.mxu0 0.0
        %274 = vmatpush1.msra.mxu0 0.0
        %275 = vmatprep.subr.mxu0 0.0
        %276 = vmatpush1.msra.mxu0 0.0
        %277 = vmatprep.subr.mxu0 0.0
        %278 = vmatpush1.msra.mxu0 0.0
        %279 = vmatprep.subr.mxu0 0.0
        %280 = vmatpush1.msra.mxu0 0.0
        %281 = vmatprep.subr.mxu0 0.0
        %282 = vmatpush1.msra.mxu0 0.0
        %283 = vmatprep.subr.mxu0 0.0
        %284 = vmatpush1.msra.mxu0 0.0
        %285 = vmatprep.subr.mxu0 0.0
        %286 = vmatpush1.msra.mxu0 0.0
        %287 = vmatprep.subr.mxu0 0.0
        %288 = vmatpush1.msra.mxu0 0.0
        %289 = vmatprep.mubr.f32.mxu0 0.0
        %290 = vmatmul.mubr.f32.gmra.mrb[0].mxu0 %v201
        %v291 = vpop.f32.mrb[0].mxu0
        %v292 = vadd.f32 %v223, %v291
        %v293 = vpop.f32.mrb[0].mxu0
        %294 = vdwg.mxu0
        %295 = vst [vmem:[%s200] sm:$0xff] %v292
        %s296 = sand.u32 %s97, 1
        %s297 = scalar_lea.sflag [#allocation4], %s296
        %s298 = sand.u32 %s97, 1
        %s299 = smul.addr %s298, 8
        %s300 = scalar_lea.vmem [#allocation7], %s299
        // Predicated region
        $region41: #{tpu_custom_call.1} parent=31 // pred_check
          %p301 = pneg %p107
        $region42: #{tpu_custom_call.1} parent=31 // pred_check_branch
          %303 = sbr.rel (%p301) target = $region44
        $region43: #{tpu_custom_call.1} parent=31 // pred_region
          %s305 = ssub.s32 128, 128
          %306 = vsyncadd %s297, %s305
          %s307 = smul.addr %s21, 128
          %s308 = scalar_lea.hbm %s3, %s307
          %s310 = sshll.u32 %s300, 4
          %s311 = int_to_ptr.vmem [resolvable:$true] %s310
          %313 = dma.vmem_to_hbm [thread:$0]  %s311, 128, %s308, %s297
        $region44: #{tpu_custom_call.1} parent=31 // pred_fallthru
          _
      $region32: #{tpu_custom_call.1} parent=5 // pred_fallthru
        _
      %p314 = scmp.le.s32.totalorder 2, %s16
      // Predicated region
      $region45: #{tpu_custom_call.1} parent=5 // pred_check
        %p315 = pneg %p314
      $region46: #{tpu_custom_call.1} parent=5 // pred_check_branch
        %317 = sbr.rel (%p315) target = $region48
      $region47: #{tpu_custom_call.1} parent=5 // pred_region
        %s318 = ssub.s32 %s16, 2
        // Predicated region
        $region49: #{tpu_custom_call.1} parent=47 // pred_check
          %p319 = pneg %p113
        $region50: #{tpu_custom_call.1} parent=47 // pred_check_branch
          %321 = sbr.rel (%p319) target = $region52
        $region51: #{tpu_custom_call.1} parent=47 // pred_region
          %s322 = sand.u32 %s98, 1
          %s323 = scalar_lea.sflag [#allocation4], %s322
          %s324 = sand.u32 %s98, 1
          %s325 = smul.addr %s324, 8
          %s326 = scalar_lea.vmem [#allocation7], %s325
          %327 = dma.done %s323, 128
        $region52: #{tpu_custom_call.1} parent=47 // pred_fallthru
          _
      $region48: #{tpu_custom_call.1} parent=5 // pred_fallthru
        _
    $region6: #{tpu_custom_call.1} parent=1 // loop_footer
      %s20 = sadd.s32 1, %s16
    $region7: #{tpu_custom_call.1} parent=1 // loop_footer_branch
      %15 = sbr.rel target = $region3
    $region8: #{tpu_custom_call.1} parent=1 // loop_exit
      _
    %328 = vsyncpa [#allocation3], 1
    %s329 = scalar_lea.sflag [#allocation3], 1
    %330 = vsyncpa %s329, 1
    %331 = vsyncpa [#allocation6], 1
    %332 = vsyncpa [#allocation4], 1
    %s333 = scalar_lea.sflag [#allocation4], 1
    %334 = vsyncpa %s333, 1

</llo_original>
